<compile_context>
chip_gen: v5e
topology: v5e:2x2
jax: 0.10.0
libtpu: 0.0.40
codegen_flags: <defaults>
</compile_context>

<pallas_src>
import functools

import jax
import jax.numpy as jnp
from jax.experimental import pallas as pl
from jax.experimental.pallas import tpu as pltpu

DIM_X = 1
DIM_Y = 1
DIM_ENC = 128
DIM_HID = 128
DEPTH = 3  # -> mlp = [ReLU, Linear(hid,hid), ReLU, Linear(hid, 2*dim_y)]
D_OUT = 2 * DIM_Y


def _round_up(a, b):
    return (a + b - 1) // b * b


def _softplus(x):
    # matches torch.nn.functional.softplus (threshold=20)
    return jnp.where(x > 20.0, x, jnp.log1p(jnp.exp(jnp.minimum(x, 20.0))))


def _decoder_kernel(matmul_dtype, enc_ref, x_ref, w1e_ref, w1x_ref, b1_ref,
                    w2_ref, b2_ref, w3_ref, b3_ref, out_ref):
    # ---- layer 1 (transposed): h_T = w1e^T @ enc^T + w1x^T * x_row + b1 ----
    # enc_ref: (TM, ENC), contracted on its last dim -> native MXU A @ B^T.
    h = jax.lax.dot_general(
        w1e_ref[...], enc_ref[...],
        dimension_numbers=(((1,), (1,)), ((), ())),
        preferred_element_type=jnp.float32)                       # (H, TM) f32
    # x contribution (DIM_X == 1): rank-1 outer product on the VPU.
    h = h + w1x_ref[...] * x_ref[...] + b1_ref[...]               # (H,1)*(1,TM)+(H,1)
    h = jnp.maximum(h, 0.0)                                       # ReLU

    # ---- layer 2: h_T = ReLU(w2^T @ h_T + b2) ----
    h = jnp.dot(w2_ref[...], h.astype(matmul_dtype),
                preferred_element_type=jnp.float32) + b2_ref[...]
    h = jnp.maximum(h, 0.0)

    # ---- layer 3: out_T = w3^T @ h_T + b3  -> (2*dim_y, TM), lane-dense ----
    out = jnp.dot(w3_ref[...], h.astype(matmul_dtype),
                  preferred_element_type=jnp.float32) + b3_ref[...]

    # rows [0, DIM_Y)          -> mu (identity)
    # rows [DIM_Y, 2*DIM_Y)    -> sigma = 0.1 + 0.9 * softplus(.)
    row = jax.lax.broadcasted_iota(jnp.int32, out.shape, 0)
    out_ref[...] = jnp.where(row < DIM_Y, out, 0.1 + 0.9 * _softplus(out))


def decoder_forward(encoded, x, params, *, tm=2048, matmul_dtype=jnp.bfloat16):
    """encoded: [B, N, dim_enc], x: [B, N, dim_x] -> (mu, sigma), each [B, N, dim_y]."""
    assert DIM_X == 1, "kernel folds x via a VPU broadcast; only dim_x == 1 supported"
    w1, b1, w2, b2, w3, b3 = params
    B, N, _ = encoded.shape
    M = B * N

    # Split + pre-transpose first-layer weight:
    #   packed @ w1 == enc @ w1[:ENC] + x @ w1[ENC:]
    w1e_t = jnp.asarray(w1[:DIM_ENC].T, dtype=matmul_dtype)       # (H, ENC)
    w1x_t = jnp.asarray(w1[DIM_ENC:].T, dtype=jnp.float32)        # (H, 1)  (VPU path)
    w2_t = jnp.asarray(w2.T, dtype=matmul_dtype)                  # (H, H)
    w3_t = jnp.asarray(w3.T, dtype=matmul_dtype)                  # (D_OUT, H)
    b1_c = jnp.asarray(b1.T, dtype=jnp.float32)                   # (H, 1)
    b2_c = jnp.asarray(b2.T, dtype=jnp.float32)                   # (H, 1)
    b3_c = jnp.asarray(b3.T, dtype=jnp.float32)                   # (D_OUT, 1)

    # Row tile: rows live on the lane axis for x/out, so TM must be a multiple
    # of 128 (or equal to M for a single full block).  Keep >= 2 grid steps when
    # M allows it (v7x megacore), no wrapper-side padding (ragged last block).
    if M <= 128:
        tm_eff = M
    else:
        tm_eff = min(_round_up(max(int(tm), 128), 128),
                     _round_up(pl.cdiv(M, 2), 128))
    grid = (pl.cdiv(M, tm_eff),)

    # encoded read from HBM in the matmul dtype (no-op if producer already bf16);
    # x is tiny -> keep f32, but lane-dense as a (1, M) row.
    enc2 = encoded.reshape(M, DIM_ENC).astype(matmul_dtype)
    x_row = x.astype(jnp.float32).reshape(DIM_X, M)

    def const_spec(shape):
        return pl.BlockSpec(shape, lambda i: (0, 0))

    mm_bytes = jnp.dtype(matmul_dtype).itemsize
    flops = 2 * M * (DIM_ENC * DIM_HID + DIM_HID * DIM_HID + DIM_HID * D_OUT)
    bytes_accessed = (M * DIM_ENC * mm_bytes + M * DIM_X * 4 + M * D_OUT * 4
                      + mm_bytes * (DIM_ENC * DIM_HID + DIM_HID * DIM_HID
                                    + DIM_HID * D_OUT)
                      + 4 * (DIM_HID * (2 + DIM_X) + D_OUT))

    out = pl.pallas_call(
        functools.partial(_decoder_kernel, matmul_dtype),
        out_shape=jax.ShapeDtypeStruct((D_OUT, M), jnp.float32),
        grid=grid,
        in_specs=[
            pl.BlockSpec((tm_eff, DIM_ENC), lambda i: (i, 0)),    # encoded rows
            pl.BlockSpec((DIM_X, tm_eff), lambda i: (0, i)),      # x, lane-dense
            const_spec((DIM_HID, DIM_ENC)),                       # w1 (enc part)^T
            const_spec((DIM_HID, DIM_X)),                         # w1 (x part)^T
            const_spec((DIM_HID, 1)),                             # b1
            const_spec((DIM_HID, DIM_HID)),                       # w2^T
            const_spec((DIM_HID, 1)),                             # b2
            const_spec((D_OUT, DIM_HID)),                         # w3^T
            const_spec((D_OUT, 1)),                               # b3
        ],
        out_specs=pl.BlockSpec((D_OUT, tm_eff), lambda i: (0, i)),  # lane-dense
        compiler_params=pltpu.CompilerParams(
            dimension_semantics=("parallel",),        # megacore-shardable
            vmem_limit_bytes=32 * 1024 * 1024),
        cost_estimate=pl.CostEstimate(
            flops=flops,
            transcendentals=2 * M * DIM_Y,
            bytes_accessed=bytes_accessed),
    )(enc2, x_row, w1e_t, w1x_t, b1_c, w2_t, b2_c, w3_t, b3_c)

    mu = out[:DIM_Y, :].T.reshape(B, N, DIM_Y)
    sigma = out[DIM_Y:, :].T.reshape(B, N, DIM_Y)
    return mu, sigma


def init_params(key):
    """Deterministic init mimicking nn.Linear defaults: U(-k, k), k = 1/sqrt(fan_in)."""
    ks = jax.random.split(key, 6)
    d_in = DIM_X + DIM_ENC

    def lin(kw, kb, fan_in, fan_out):
        k = 1.0 / jnp.sqrt(jnp.float32(fan_in))
        w = jax.random.uniform(kw, (fan_in, fan_out), jnp.float32, -k, k)
        b = jax.random.uniform(kb, (1, fan_out), jnp.float32, -k, k)
        return w, b

    w1, b1 = lin(ks[0], ks[1], d_in, DIM_HID)
    w2, b2 = lin(ks[2], ks[3], DIM_HID, DIM_HID)
    w3, b3 = lin(ks[4], ks[5], DIM_HID, D_OUT)
    return (w1, b1, w2, b2, w3, b3)


def decoder_reference(encoded, x, params):
    """Pure-JAX f32 reference of the same forward pass."""
    w1, b1, w2, b2, w3, b3 = params
    hp = jax.lax.Precision.HIGHEST
    packed = jnp.concatenate([encoded, x], axis=-1)
    h = jnp.maximum(jnp.dot(packed, w1, precision=hp) + b1[0], 0.0)
    h = jnp.maximum(jnp.dot(h, w2, precision=hp) + b2[0], 0.0)
    out = jnp.dot(h, w3, precision=hp) + b3[0]
    mu, sig_raw = out[..., :DIM_Y], out[..., DIM_Y:]
    return mu, 0.1 + 0.9 * _softplus(sig_raw)


if __name__ == "__main__":
    key = jax.random.PRNGKey(0)
    k_enc, k_x, k_p, k_enc2, k_x2 = jax.random.split(key, 5)
    params = init_params(k_p)

    # Small canonical shape, f32 matmul path (tight wiring check, single block).
    B, N = 2, 8
    encoded = jax.random.normal(k_enc, (B, N, DIM_ENC), jnp.float32)
    x = jax.random.normal(k_x, (B, N, DIM_X), jnp.float32)

    mu, sigma = decoder_forward(encoded, x, params, matmul_dtype=jnp.float32)
    mu = jax.block_until_ready(mu)
    sigma = jax.block_until_ready(sigma)

    mu_ref, sigma_ref = decoder_reference(encoded, x, params)
    assert mu.shape == (B, N, DIM_Y) and sigma.shape == (B, N, DIM_Y)
    assert jnp.allclose(mu, mu_ref, atol=1e-3, rtol=1e-3)
    assert jnp.allclose(sigma, sigma_ref, atol=1e-3, rtol=1e-3)
    assert bool(jnp.all(sigma > 0.0))

    # Larger, ragged-M case on the default bf16 matmul path (multiple grid
    # steps, ragged last block handled by Pallas, no wrapper-side padding).
    B2, N2 = 3, 500  # M = 1500, tm=512 -> grid=(3,), last block ragged
    encoded2 = jax.random.normal(k_enc2, (B2, N2, DIM_ENC), jnp.float32)
    x2 = jax.random.normal(k_x2, (B2, N2, DIM_X), jnp.float32)

    mu2, sigma2 = decoder_forward(encoded2, x2, params, tm=512)
    mu2 = jax.block_until_ready(mu2)
    sigma2 = jax.block_until_ready(sigma2)

    mu2_ref, sigma2_ref = decoder_reference(encoded2, x2, params)
    # bf16 matmul operands (f32 accumulation) -> loosened tolerance.
    assert jnp.allclose(mu2, mu2_ref, atol=1e-1, rtol=1e-1)
    assert jnp.allclose(sigma2, sigma2_ref, atol=1e-1, rtol=1e-1)
    assert bool(jnp.all(jnp.isfinite(mu2))) and bool(jnp.all(sigma2 > 0.0))

    print("KERNEL_OK")
</pallas_src>

<mosaic_0001>
module attributes {stable_mosaic.version = 11 : i64} {
  func.func @_decoder_kernel(%arg0: i32, %arg1: memref<16x128xf32, #tpu.memory_space<vmem>>, %arg2: memref<1x16xf32, #tpu.memory_space<vmem>>, %arg3: memref<128x128xf32, #tpu.memory_space<vmem>>, %arg4: memref<128x1xf32, #tpu.memory_space<vmem>>, %arg5: memref<128x1xf32, #tpu.memory_space<vmem>>, %arg6: memref<128x128xf32, #tpu.memory_space<vmem>>, %arg7: memref<128x1xf32, #tpu.memory_space<vmem>>, %arg8: memref<2x128xf32, #tpu.memory_space<vmem>>, %arg9: memref<2x1xf32, #tpu.memory_space<vmem>>, %arg10: memref<2x16xf32, #tpu.memory_space<vmem>>) attributes {dimension_semantics = [#tpu.dimension_semantics<parallel>], iteration_bounds = array<i64: 1>, scalar_prefetch = 0 : i64, scratch_operands = 0 : i64, tpu.core_type = #tpu.core_type<tc>, window_params = [{transform_indices = @transform_0, window_bounds = array<i64: 16, 128>}, {transform_indices = @transform_1, window_bounds = array<i64: 1, 16>}, {pipeline_mode = #tpu.pipeline_mode<synchronous>, transform_indices = @transform_2, window_bounds = array<i64: 128, 128>}, {pipeline_mode = #tpu.pipeline_mode<synchronous>, transform_indices = @transform_3, window_bounds = array<i64: 128, 1>}, {pipeline_mode = #tpu.pipeline_mode<synchronous>, transform_indices = @transform_4, window_bounds = array<i64: 128, 1>}, {pipeline_mode = #tpu.pipeline_mode<synchronous>, transform_indices = @transform_5, window_bounds = array<i64: 128, 128>}, {pipeline_mode = #tpu.pipeline_mode<synchronous>, transform_indices = @transform_6, window_bounds = array<i64: 128, 1>}, {pipeline_mode = #tpu.pipeline_mode<synchronous>, transform_indices = @transform_7, window_bounds = array<i64: 2, 128>}, {pipeline_mode = #tpu.pipeline_mode<synchronous>, transform_indices = @transform_8, window_bounds = array<i64: 2, 1>}, {transform_indices = @transform_9, window_bounds = array<i64: 2, 16>}]} {
    %c0 = arith.constant 0 : index
    %c0_0 = arith.constant 0 : index
    %0 = vector.load %arg3[%c0, %c0_0] : memref<128x128xf32, #tpu.memory_space<vmem>>, vector<128x128xf32>
    %c0_1 = arith.constant 0 : index
    %c0_2 = arith.constant 0 : index
    %1 = vector.load %arg1[%c0_1, %c0_2] : memref<16x128xf32, #tpu.memory_space<vmem>>, vector<16x128xf32>
    %cst = arith.constant dense<0.000000e+00> : vector<128x16xf32>
    %2 = tpu.matmul %0, %1, %cst {dimension_numbers = #tpu.dot_dimension_numbers<[1], [1], [0], [0], [0, 0, 1, 0], [], []>} : vector<128x128xf32>, vector<16x128xf32>, vector<128x16xf32> -> vector<128x16xf32>
    %c0_3 = arith.constant 0 : index
    %c0_4 = arith.constant 0 : index
    %3 = vector.load %arg4[%c0_3, %c0_4] : memref<128x1xf32, #tpu.memory_space<vmem>>, vector<128x1xf32>
    %c0_5 = arith.constant 0 : index
    %c0_6 = arith.constant 0 : index
    %4 = vector.load %arg2[%c0_5, %c0_6] : memref<1x16xf32, #tpu.memory_space<vmem>>, vector<1x16xf32>
    %5 = vector.broadcast %3 : vector<128x1xf32> to vector<128x16xf32>
    %6 = vector.broadcast %4 : vector<1x16xf32> to vector<128x16xf32>
    %7 = arith.mulf %5, %6 : vector<128x16xf32>
    %8 = arith.addf %2, %7 : vector<128x16xf32>
    %c0_7 = arith.constant 0 : index
    %c0_8 = arith.constant 0 : index
    %9 = vector.load %arg5[%c0_7, %c0_8] : memref<128x1xf32, #tpu.memory_space<vmem>>, vector<128x1xf32>
    %10 = vector.broadcast %9 : vector<128x1xf32> to vector<128x16xf32>
    %11 = arith.addf %8, %10 : vector<128x16xf32>
    %cst_9 = arith.constant 0.000000e+00 : f32
    %12 = vector.broadcast %cst_9 : f32 to vector<128x16xf32>
    %13 = arith.maximumf %11, %12 : vector<128x16xf32>
    %c0_10 = arith.constant 0 : index
    %c0_11 = arith.constant 0 : index
    %14 = vector.load %arg6[%c0_10, %c0_11] : memref<128x128xf32, #tpu.memory_space<vmem>>, vector<128x128xf32>
    %cst_12 = arith.constant dense<0.000000e+00> : vector<128x16xf32>
    %15 = tpu.matmul %14, %13, %cst_12 {dimension_numbers = #tpu.dot_dimension_numbers<[1], [0], [0], [1], [0, 0, 1, 1], [], []>} : vector<128x128xf32>, vector<128x16xf32>, vector<128x16xf32> -> vector<128x16xf32>
    %c0_13 = arith.constant 0 : index
    %c0_14 = arith.constant 0 : index
    %16 = vector.load %arg7[%c0_13, %c0_14] : memref<128x1xf32, #tpu.memory_space<vmem>>, vector<128x1xf32>
    %17 = vector.broadcast %16 : vector<128x1xf32> to vector<128x16xf32>
    %18 = arith.addf %15, %17 : vector<128x16xf32>
    %cst_15 = arith.constant 0.000000e+00 : f32
    %19 = vector.broadcast %cst_15 : f32 to vector<128x16xf32>
    %20 = arith.maximumf %18, %19 : vector<128x16xf32>
    %c0_16 = arith.constant 0 : index
    %c0_17 = arith.constant 0 : index
    %21 = vector.load %arg8[%c0_16, %c0_17] : memref<2x128xf32, #tpu.memory_space<vmem>>, vector<2x128xf32>
    %cst_18 = arith.constant dense<0.000000e+00> : vector<2x16xf32>
    %22 = tpu.matmul %21, %20, %cst_18 {dimension_numbers = #tpu.dot_dimension_numbers<[1], [0], [0], [1], [0, 0, 1, 1], [], []>} : vector<2x128xf32>, vector<128x16xf32>, vector<2x16xf32> -> vector<2x16xf32>
    %c0_19 = arith.constant 0 : index
    %c0_20 = arith.constant 0 : index
    %23 = vector.load %arg9[%c0_19, %c0_20] : memref<2x1xf32, #tpu.memory_space<vmem>>, vector<2x1xf32>
    %24 = vector.broadcast %23 : vector<2x1xf32> to vector<2x16xf32>
    %25 = arith.addf %22, %24 : vector<2x16xf32>
    %26 = tpu.iota {dimensions = array<i32: 0>} : vector<2x16xi32>
    %c1_i32 = arith.constant 1 : i32
    %27 = vector.broadcast %c1_i32 : i32 to vector<2x16xi32>
    %28 = arith.cmpi slt, %26, %27 : vector<2x16xi32>
    %cst_21 = arith.constant 2.000000e+01 : f32
    %29 = vector.broadcast %cst_21 : f32 to vector<2x16xf32>
    %30 = arith.cmpf ogt, %25, %29 : vector<2x16xf32>
    %cst_22 = arith.constant 2.000000e+01 : f32
    %31 = vector.broadcast %cst_22 : f32 to vector<2x16xf32>
    %32 = arith.minimumf %25, %31 : vector<2x16xf32>
    %33 = math.exp %32 : vector<2x16xf32>
    %34 = math.log1p %33 : vector<2x16xf32>
    %35 = arith.select %30, %25, %34 : vector<2x16xi1>, vector<2x16xf32>
    %cst_23 = arith.constant 0.899999976 : f32
    %36 = vector.broadcast %cst_23 : f32 to vector<2x16xf32>
    %37 = arith.mulf %36, %35 : vector<2x16xf32>
    %cst_24 = arith.constant 1.000000e-01 : f32
    %38 = vector.broadcast %cst_24 : f32 to vector<2x16xf32>
    %39 = arith.addf %38, %37 : vector<2x16xf32>
    %40 = arith.select %28, %25, %39 : vector<2x16xi1>, vector<2x16xf32>
    %c0_25 = arith.constant 0 : index
    %c0_26 = arith.constant 0 : index
    %41 = vector.load %arg10[%c0_25, %c0_26] : memref<2x16xf32, #tpu.memory_space<vmem>>, vector<2x16xf32>
    tpu.vector_store %arg10[%c0_25, %c0_26], %40 {strides = array<i32>} : memref<2x16xf32, #tpu.memory_space<vmem>>, vector<2x16xf32>,
    return
  }
  func.func @transform_0(%arg0: i32) -> (i32, i32) {
    %c0_i32 = arith.constant 0 : i32
    %c0_i32_0 = arith.constant 0 : i32
    return %arg0, %c0_i32 : i32, i32
  }
  func.func @transform_1(%arg0: i32) -> (i32, i32) {
    %c0_i32 = arith.constant 0 : i32
    %c0_i32_0 = arith.constant 0 : i32
    return %c0_i32, %arg0 : i32, i32
  }
  func.func @transform_2(%arg0: i32) -> (i32, i32) {
    %c0_i32 = arith.constant 0 : i32
    %c0_i32_0 = arith.constant 0 : i32
    %c0_i32_1 = arith.constant 0 : i32
    return %c0_i32, %c0_i32_0 : i32, i32
  }
  func.func @transform_3(%arg0: i32) -> (i32, i32) {
    %c0_i32 = arith.constant 0 : i32
    %c0_i32_0 = arith.constant 0 : i32
    %c0_i32_1 = arith.constant 0 : i32
    return %c0_i32, %c0_i32_0 : i32, i32
  }
  func.func @transform_4(%arg0: i32) -> (i32, i32) {
    %c0_i32 = arith.constant 0 : i32
    %c0_i32_0 = arith.constant 0 : i32
    %c0_i32_1 = arith.constant 0 : i32
    return %c0_i32, %c0_i32_0 : i32, i32
  }
  func.func @transform_5(%arg0: i32) -> (i32, i32) {
    %c0_i32 = arith.constant 0 : i32
    %c0_i32_0 = arith.constant 0 : i32
    %c0_i32_1 = arith.constant 0 : i32
    return %c0_i32, %c0_i32_0 : i32, i32
  }
  func.func @transform_6(%arg0: i32) -> (i32, i32) {
    %c0_i32 = arith.constant 0 : i32
    %c0_i32_0 = arith.constant 0 : i32
    %c0_i32_1 = arith.constant 0 : i32
    return %c0_i32, %c0_i32_0 : i32, i32
  }
  func.func @transform_7(%arg0: i32) -> (i32, i32) {
    %c0_i32 = arith.constant 0 : i32
    %c0_i32_0 = arith.constant 0 : i32
    %c0_i32_1 = arith.constant 0 : i32
    return %c0_i32, %c0_i32_0 : i32, i32
  }
  func.func @transform_8(%arg0: i32) -> (i32, i32) {
    %c0_i32 = arith.constant 0 : i32
    %c0_i32_0 = arith.constant 0 : i32
    %c0_i32_1 = arith.constant 0 : i32
    return %c0_i32, %c0_i32_0 : i32, i32
  }
  func.func @transform_9(%arg0: i32) -> (i32, i32) {
    %c0_i32 = arith.constant 0 : i32
    %c0_i32_0 = arith.constant 0 : i32
    return %c0_i32, %arg0 : i32, i32
  }
}

</mosaic_0001>

<llo_original>
// kernel: tpu_custom_call.1
$region0: #{tpu_custom_call.1}
  #allocation0 [shape = 'u32[]', space=smem, size = 0x4, offset = 0x4, fixed_abs, tag = 'smem constant byte address 0x4 - core index']
  #allocation1 [shape = 'u32[72,128]{1,0:T(1,128)}', space=vmem, size = 0x9000, scoped, tag = 'internal scratch']
  %s0 = inlined_call_operand.vmem [shape: f32[16,128], index: 0, kind: input, shape index: {}]
  %s1 = inlined_call_operand.vmem [shape: f32[1,16], index: 1, kind: input, shape index: {}]
  %s2 = inlined_call_operand.vmem [shape: f32[128,128], index: 2, kind: input, shape index: {}]
  %s3 = inlined_call_operand.vmem [shape: f32[128,1], index: 3, kind: input, shape index: {}]
  %s4 = inlined_call_operand.vmem [shape: f32[128,1], index: 4, kind: input, shape index: {}]
  %s5 = inlined_call_operand.vmem [shape: f32[128,128], index: 5, kind: input, shape index: {}]
  %s6 = inlined_call_operand.vmem [shape: f32[128,1], index: 6, kind: input, shape index: {}]
  %s7 = inlined_call_operand.vmem [shape: f32[2,128], index: 7, kind: input, shape index: {}]
  %s8 = inlined_call_operand.vmem [shape: f32[2,1], index: 8, kind: input, shape index: {}]
  %s9 = inlined_call_operand.hbm [shape: f32[2,16], index: 9, kind: output, shape index: {}]
  %s10 = sld [smem:[#allocation0]]
  $region46: #{tpu_custom_call.1} parent=0
    _
  %s12 = ssub.s32 1, %s10
  %s13 = scalar_select 0, %s12, %s10
  $region1: #{tpu_custom_call.1} parent=0
    #allocation2 [shape = 'u8[1024]{0}', space=vmem, size = 0x400, scoped, tag = 'output window, operand 0, single buffered']
    #allocation3 [shape = 's32[1]{0}', space=sflag, size = 0x4, scoped, tag = 'scoped memory for tpu_custom_call.1']
    %14 = vsyncpa [#allocation3], 0
    // Predicated region
    $region2: #{tpu_custom_call.1} parent=1 // pred_check
      _
    $region3: #{tpu_custom_call.1} parent=1 // pred_check_branch
      %16 = sbr.rel (0) target = $region5
    $region4: #{tpu_custom_call.1} parent=1 // pred_region
      _
    $region5: #{tpu_custom_call.1} parent=1 // pred_fallthru
      _
    // Predicated region
    $region6: #{tpu_custom_call.1} parent=1 // pred_check
      _
    $region7: #{tpu_custom_call.1} parent=1 // pred_check_branch
      %18 = sbr.rel (0) target = $region9
    $region8: #{tpu_custom_call.1} parent=1 // pred_region
      _
    $region9: #{tpu_custom_call.1} parent=1 // pred_fallthru
      _
    // Predicated region
    $region10: #{tpu_custom_call.1} parent=1 // pred_check
      _
    $region11: #{tpu_custom_call.1} parent=1 // pred_check_branch
      %20 = sbr.rel (0) target = $region13
    $region12: #{tpu_custom_call.1} parent=1 // pred_region
      _
    $region13: #{tpu_custom_call.1} parent=1 // pred_fallthru
      _
    // Predicated region
    $region14: #{tpu_custom_call.1} parent=1 // pred_check
      _
    $region15: #{tpu_custom_call.1} parent=1 // pred_check_branch
      %22 = sbr.rel (0) target = $region17
    $region16: #{tpu_custom_call.1} parent=1 // pred_region
      _
    $region17: #{tpu_custom_call.1} parent=1 // pred_fallthru
      _
    // Predicated region
    $region18: #{tpu_custom_call.1} parent=1 // pred_check
      _
    $region19: #{tpu_custom_call.1} parent=1 // pred_check_branch
      %24 = sbr.rel (0) target = $region21
    $region20: #{tpu_custom_call.1} parent=1 // pred_region
      _
    $region21: #{tpu_custom_call.1} parent=1 // pred_fallthru
      _
    // Predicated region
    $region22: #{tpu_custom_call.1} parent=1 // pred_check
      _
    $region23: #{tpu_custom_call.1} parent=1 // pred_check_branch
      %26 = sbr.rel (0) target = $region25
    $region24: #{tpu_custom_call.1} parent=1 // pred_region
      _
    $region25: #{tpu_custom_call.1} parent=1 // pred_fallthru
      _
    // Predicated region
    $region26: #{tpu_custom_call.1} parent=1 // pred_check
      _
    $region27: #{tpu_custom_call.1} parent=1 // pred_check_branch
      %28 = sbr.rel (0) target = $region29
    $region28: #{tpu_custom_call.1} parent=1 // pred_region
      _
    $region29: #{tpu_custom_call.1} parent=1 // pred_fallthru
      _
    // Predicated region
    $region30: #{tpu_custom_call.1} parent=1 // pred_check
      _
    $region31: #{tpu_custom_call.1} parent=1 // pred_check_branch
      %30 = sbr.rel (0) target = $region33
    $region32: #{tpu_custom_call.1} parent=1 // pred_region
      _
    $region33: #{tpu_custom_call.1} parent=1 // pred_fallthru
      _
    // Predicated region
    $region34: #{tpu_custom_call.1} parent=1 // pred_check
      _
    $region35: #{tpu_custom_call.1} parent=1 // pred_check_branch
      %32 = sbr.rel (0) target = $region37
    $region36: #{tpu_custom_call.1} parent=1 // pred_region
      _
    $region37: #{tpu_custom_call.1} parent=1 // pred_fallthru
      _
    %v33 = vld [vmem:[%s2] sm:$0xff]
    %v34 = vld [vmem:[%s2 + $0x8] sm:$0xff]
    %v35 = vld [vmem:[%s2 + $0x10] sm:$0xff]
    %v36 = vld [vmem:[%s2 + $0x18] sm:$0xff]
    %v37 = vld [vmem:[%s2 + $0x20] sm:$0xff]
    %v38 = vld [vmem:[%s2 + $0x28] sm:$0xff]
    %v39 = vld [vmem:[%s2 + $0x30] sm:$0xff]
    %v40 = vld [vmem:[%s2 + $0x38] sm:$0xff]
    %v41 = vld [vmem:[%s2 + $0x40] sm:$0xff]
    %v42 = vld [vmem:[%s2 + $0x48] sm:$0xff]
    %v43 = vld [vmem:[%s2 + $0x50] sm:$0xff]
    %v44 = vld [vmem:[%s2 + $0x58] sm:$0xff]
    %v45 = vld [vmem:[%s2 + $0x60] sm:$0xff]
    %v46 = vld [vmem:[%s2 + $0x68] sm:$0xff]
    %v47 = vld [vmem:[%s2 + $0x70] sm:$0xff]
    %v48 = vld [vmem:[%s2 + $0x78] sm:$0xff]
    %v49 = vld [vmem:[%s0] sm:$0xff]
    %v50 = vld [vmem:[%s0 + $0x8] sm:$0xff]
    %v51 = vld [vmem:[%s3] sm:$0xff]
    %v52 = vld [vmem:[%s3 + $0x8] sm:$0xff]
    %v53 = vld [vmem:[%s3 + $0x10] sm:$0xff]
    %v54 = vld [vmem:[%s3 + $0x18] sm:$0xff]
    %v55 = vld [vmem:[%s3 + $0x20] sm:$0xff]
    %v56 = vld [vmem:[%s3 + $0x28] sm:$0xff]
    %v57 = vld [vmem:[%s3 + $0x30] sm:$0xff]
    %v58 = vld [vmem:[%s3 + $0x38] sm:$0xff]
    %v59 = vld [vmem:[%s3 + $0x40] sm:$0xff]
    %v60 = vld [vmem:[%s3 + $0x48] sm:$0xff]
    %v61 = vld [vmem:[%s3 + $0x50] sm:$0xff]
    %v62 = vld [vmem:[%s3 + $0x58] sm:$0xff]
    %v63 = vld [vmem:[%s3 + $0x60] sm:$0xff]
    %v64 = vld [vmem:[%s3 + $0x68] sm:$0xff]
    %v65 = vld [vmem:[%s3 + $0x70] sm:$0xff]
    %v66 = vld [vmem:[%s3 + $0x78] sm:$0xff]
    %v67 = vld [vmem:[%s1] sm:$0x1]
    %69 = vset.pattern.permute.xlu0 0
    %70 = vperm.xlu0 %69, %v51
    %v71 = vpop.permute.xlu0 %70
    %74 = vset.pattern.permute.xlu0 0
    %75 = vperm.xlu0 %74, %v52
    %v76 = vpop.permute.xlu0 %75
    %79 = vset.pattern.permute.xlu0 0
    %80 = vperm.xlu0 %79, %v53
    %v81 = vpop.permute.xlu0 %80
    %84 = vset.pattern.permute.xlu0 0
    %85 = vperm.xlu0 %84, %v54
    %v86 = vpop.permute.xlu0 %85
    %89 = vset.pattern.permute.xlu0 0
    %90 = vperm.xlu0 %89, %v55
    %v91 = vpop.permute.xlu0 %90
    %94 = vset.pattern.permute.xlu0 0
    %95 = vperm.xlu0 %94, %v56
    %v96 = vpop.permute.xlu0 %95
    %99 = vset.pattern.permute.xlu0 0
    %100 = vperm.xlu0 %99, %v57
    %v101 = vpop.permute.xlu0 %100
    %104 = vset.pattern.permute.xlu0 0
    %105 = vperm.xlu0 %104, %v58
    %v106 = vpop.permute.xlu0 %105
    %109 = vset.pattern.permute.xlu0 0
    %110 = vperm.xlu0 %109, %v59
    %v111 = vpop.permute.xlu0 %110
    %114 = vset.pattern.permute.xlu0 0
    %115 = vperm.xlu0 %114, %v60
    %v116 = vpop.permute.xlu0 %115
    %119 = vset.pattern.permute.xlu0 0
    %120 = vperm.xlu0 %119, %v61
    %v121 = vpop.permute.xlu0 %120
    %124 = vset.pattern.permute.xlu0 0
    %125 = vperm.xlu0 %124, %v62
    %v126 = vpop.permute.xlu0 %125
    %129 = vset.pattern.permute.xlu0 0
    %130 = vperm.xlu0 %129, %v63
    %v131 = vpop.permute.xlu0 %130
    %134 = vset.pattern.permute.xlu0 0
    %135 = vperm.xlu0 %134, %v64
    %v136 = vpop.permute.xlu0 %135
    %139 = vset.pattern.permute.xlu0 0
    %140 = vperm.xlu0 %139, %v65
    %v141 = vpop.permute.xlu0 %140
    %144 = vset.pattern.permute.xlu0 0
    %145 = vperm.xlu0 %144, %v66
    %v146 = vpop.permute.xlu0 %145
    %v149 = vperm.slane %v67, 0
    %v151 = vmul.f32 %v71, %v149
    %v152 = vmul.f32 %v76, %v149
    %v153 = vmul.f32 %v81, %v149
    %v154 = vmul.f32 %v86, %v149
    %v155 = vmul.f32 %v91, %v149
    %v156 = vmul.f32 %v96, %v149
    %v157 = vmul.f32 %v101, %v149
    %v158 = vmul.f32 %v106, %v149
    %v159 = vmul.f32 %v111, %v149
    %v160 = vmul.f32 %v116, %v149
    %v161 = vmul.f32 %v121, %v149
    %v162 = vmul.f32 %v126, %v149
    %v163 = vmul.f32 %v131, %v149
    %v164 = vmul.f32 %v136, %v149
    %v165 = vmul.f32 %v141, %v149
    %v166 = vmul.f32 %v146, %v149
    %167 = vmatpush.xpose.msra.mxu0 0.0
    %168 = vmatpush.xpose.msra.mxu0 0.0
    %169 = vmatpush.xpose.msra.mxu0 0.0
    %170 = vmatpush.xpose.msra.mxu0 0.0
    %171 = vmatpush.xpose.msra.mxu0 0.0
    %172 = vmatpush.xpose.msra.mxu0 0.0
    %173 = vmatpush.xpose.msra.mxu0 0.0
    %174 = vmatpush.xpose.msra.mxu0 0.0
    %175 = vmatpush.xpose.msra.mxu0 0.0
    %176 = vmatpush.xpose.msra.mxu0 0.0
    %177 = vmatpush.xpose.msra.mxu0 0.0
    %178 = vmatpush.xpose.msra.mxu0 0.0
    %179 = vmatpush.xpose.msra.mxu0 0.0
    %180 = vmatpush.xpose.msra.mxu0 0.0
    %181 = vmatpush.xpose.msra.mxu0 %v50
    %182 = vmatpush.xpose.msra.mxu0 %v49
    %183 = vmatmul.f32.gmra.mxu0 %v33
    %v184 = vpop.f32.mrf.mxu0
    %v185 = vadd.f32 %v151, %v184
    %186 = vmatmul.f32.gmra.mxu0 %v34
    %v187 = vpop.f32.mrf.mxu0
    %v188 = vadd.f32 %v152, %v187
    %189 = vmatmul.f32.gmra.mxu0 %v35
    %v190 = vpop.f32.mrf.mxu0
    %v191 = vadd.f32 %v153, %v190
    %192 = vmatmul.f32.gmra.mxu0 %v36
    %v193 = vpop.f32.mrf.mxu0
    %v194 = vadd.f32 %v154, %v193
    %195 = vmatmul.f32.gmra.mxu0 %v37
    %v196 = vpop.f32.mrf.mxu0
    %v197 = vadd.f32 %v155, %v196
    %198 = vmatmul.f32.gmra.mxu0 %v38
    %v199 = vpop.f32.mrf.mxu0
    %v200 = vadd.f32 %v156, %v199
    %201 = vmatmul.f32.gmra.mxu0 %v39
    %v202 = vpop.f32.mrf.mxu0
    %v203 = vadd.f32 %v157, %v202
    %204 = vmatmul.f32.gmra.mxu0 %v40
    %v205 = vpop.f32.mrf.mxu0
    %v206 = vadd.f32 %v158, %v205
    %207 = vmatmul.f32.gmra.mxu0 %v41
    %v208 = vpop.f32.mrf.mxu0
    %v209 = vadd.f32 %v159, %v208
    %210 = vmatmul.f32.gmra.mxu0 %v42
    %v211 = vpop.f32.mrf.mxu0
    %v212 = vadd.f32 %v160, %v211
    %213 = vmatmul.f32.gmra.mxu0 %v43
    %v214 = vpop.f32.mrf.mxu0
    %v215 = vadd.f32 %v161, %v214
    %216 = vmatmul.f32.gmra.mxu0 %v44
    %v217 = vpop.f32.mrf.mxu0
    %v218 = vadd.f32 %v162, %v217
    %219 = vmatmul.f32.gmra.mxu0 %v45
    %v220 = vpop.f32.mrf.mxu0
    %v221 = vadd.f32 %v163, %v220
    %222 = vmatmul.f32.gmra.mxu0 %v46
    %v223 = vpop.f32.mrf.mxu0
    %v224 = vadd.f32 %v164, %v223
    %225 = vmatmul.f32.gmra.mxu0 %v47
    %v226 = vpop.f32.mrf.mxu0
    %v227 = vadd.f32 %v165, %v226
    %228 = vmatmul.f32.gmra.mxu0 %v48
    %v229 = vpop.f32.mrf.mxu0
    %v230 = vadd.f32 %v166, %v229
    %231 = vdwg.mxu0
    %v232 = vld [vmem:[%s4] sm:$0xff]
    %v233 = vld [vmem:[%s4 + $0x8] sm:$0xff]
    %v234 = vld [vmem:[%s4 + $0x10] sm:$0xff]
    %v235 = vld [vmem:[%s4 + $0x18] sm:$0xff]
    %v236 = vld [vmem:[%s4 + $0x20] sm:$0xff]
    %v237 = vld [vmem:[%s4 + $0x28] sm:$0xff]
    %v238 = vld [vmem:[%s4 + $0x30] sm:$0xff]
    %v239 = vld [vmem:[%s4 + $0x38] sm:$0xff]
    %v240 = vld [vmem:[%s4 + $0x40] sm:$0xff]
    %v241 = vld [vmem:[%s4 + $0x48] sm:$0xff]
    %v242 = vld [vmem:[%s4 + $0x50] sm:$0xff]
    %v243 = vld [vmem:[%s4 + $0x58] sm:$0xff]
    %v244 = vld [vmem:[%s4 + $0x60] sm:$0xff]
    %v245 = vld [vmem:[%s4 + $0x68] sm:$0xff]
    %v246 = vld [vmem:[%s4 + $0x70] sm:$0xff]
    %v247 = vld [vmem:[%s4 + $0x78] sm:$0xff]
    %249 = vset.pattern.permute.xlu0 0
    %250 = vperm.xlu0 %249, %v232
    %v251 = vpop.permute.xlu0 %250
    %254 = vset.pattern.permute.xlu0 0
    %255 = vperm.xlu0 %254, %v233
    %v256 = vpop.permute.xlu0 %255
    %259 = vset.pattern.permute.xlu0 0
    %260 = vperm.xlu0 %259, %v234
    %v261 = vpop.permute.xlu0 %260
    %264 = vset.pattern.permute.xlu0 0
    %265 = vperm.xlu0 %264, %v235
    %v266 = vpop.permute.xlu0 %265
    %269 = vset.pattern.permute.xlu0 0
    %270 = vperm.xlu0 %269, %v236
    %v271 = vpop.permute.xlu0 %270
    %274 = vset.pattern.permute.xlu0 0
    %275 = vperm.xlu0 %274, %v237
    %v276 = vpop.permute.xlu0 %275
    %279 = vset.pattern.permute.xlu0 0
    %280 = vperm.xlu0 %279, %v238
    %v281 = vpop.permute.xlu0 %280
    %284 = vset.pattern.permute.xlu0 0
    %285 = vperm.xlu0 %284, %v239
    %v286 = vpop.permute.xlu0 %285
    %289 = vset.pattern.permute.xlu0 0
    %290 = vperm.xlu0 %289, %v240
    %v291 = vpop.permute.xlu0 %290
    %294 = vset.pattern.permute.xlu0 0
    %295 = vperm.xlu0 %294, %v241
    %v296 = vpop.permute.xlu0 %295
    %299 = vset.pattern.permute.xlu0 0
    %300 = vperm.xlu0 %299, %v242
    %v301 = vpop.permute.xlu0 %300
    %304 = vset.pattern.permute.xlu0 0
    %305 = vperm.xlu0 %304, %v243
    %v306 = vpop.permute.xlu0 %305
    %309 = vset.pattern.permute.xlu0 0
    %310 = vperm.xlu0 %309, %v244
    %v311 = vpop.permute.xlu0 %310
    %314 = vset.pattern.permute.xlu0 0
    %315 = vperm.xlu0 %314, %v245
    %v316 = vpop.permute.xlu0 %315
    %319 = vset.pattern.permute.xlu0 0
    %320 = vperm.xlu0 %319, %v246
    %v321 = vpop.permute.xlu0 %320
    %324 = vset.pattern.permute.xlu0 0
    %325 = vperm.xlu0 %324, %v247
    %v326 = vpop.permute.xlu0 %325
    %v328 = vadd.f32 %v185, %v251
    %v329 = vadd.f32 %v188, %v256
    %v330 = vadd.f32 %v191, %v261
    %v331 = vadd.f32 %v194, %v266
    %v332 = vadd.f32 %v197, %v271
    %v333 = vadd.f32 %v200, %v276
    %v334 = vadd.f32 %v203, %v281
    %v335 = vadd.f32 %v206, %v286
    %v336 = vadd.f32 %v209, %v291
    %v337 = vadd.f32 %v212, %v296
    %v338 = vadd.f32 %v215, %v301
    %v339 = vadd.f32 %v218, %v306
    %v340 = vadd.f32 %v221, %v311
    %v341 = vadd.f32 %v224, %v316
    %v342 = vadd.f32 %v227, %v321
    %v343 = vadd.f32 %v230, %v326
    %v344 = vmax.f32 %v328, 0.0
    %v345 = vmax.f32 %v329, 0.0
    %v346 = vmax.f32 %v330, 0.0
    %v347 = vmax.f32 %v331, 0.0
    %v348 = vmax.f32 %v332, 0.0
    %v349 = vmax.f32 %v333, 0.0
    %v350 = vmax.f32 %v334, 0.0
    %v351 = vmax.f32 %v335, 0.0
    %v352 = vmax.f32 %v336, 0.0
    %v353 = vmax.f32 %v337, 0.0
    %v354 = vmax.f32 %v338, 0.0
    %v355 = vmax.f32 %v339, 0.0
    %v356 = vmax.f32 %v340, 0.0
    %v357 = vmax.f32 %v341, 0.0
    %v358 = vmax.f32 %v342, 0.0
    %v359 = vmax.f32 %v343, 0.0
    %v360 = vld [vmem:[%s5] sm:$0xff]
    %v361 = vld [vmem:[%s5 + $0x8] sm:$0xff]
    %v362 = vld [vmem:[%s5 + $0x10] sm:$0xff]
    %v363 = vld [vmem:[%s5 + $0x18] sm:$0xff]
    %v364 = vld [vmem:[%s5 + $0x20] sm:$0xff]
    %v365 = vld [vmem:[%s5 + $0x28] sm:$0xff]
    %v366 = vld [vmem:[%s5 + $0x30] sm:$0xff]
    %v367 = vld [vmem:[%s5 + $0x38] sm:$0xff]
    %v368 = vld [vmem:[%s5 + $0x40] sm:$0xff]
    %v369 = vld [vmem:[%s5 + $0x48] sm:$0xff]
    %v370 = vld [vmem:[%s5 + $0x50] sm:$0xff]
    %v371 = vld [vmem:[%s5 + $0x58] sm:$0xff]
    %v372 = vld [vmem:[%s5 + $0x60] sm:$0xff]
    %v373 = vld [vmem:[%s5 + $0x68] sm:$0xff]
    %v374 = vld [vmem:[%s5 + $0x70] sm:$0xff]
    %v375 = vld [vmem:[%s5 + $0x78] sm:$0xff]
    %v376 = vld [vmem:[%s6] sm:$0xff]
    %v377 = vld [vmem:[%s6 + $0x8] sm:$0xff]
    %v378 = vld [vmem:[%s6 + $0x10] sm:$0xff]
    %v379 = vld [vmem:[%s6 + $0x18] sm:$0xff]
    %v380 = vld [vmem:[%s6 + $0x20] sm:$0xff]
    %v381 = vld [vmem:[%s6 + $0x28] sm:$0xff]
    %v382 = vld [vmem:[%s6 + $0x30] sm:$0xff]
    %v383 = vld [vmem:[%s6 + $0x38] sm:$0xff]
    %v384 = vld [vmem:[%s6 + $0x40] sm:$0xff]
    %v385 = vld [vmem:[%s6 + $0x48] sm:$0xff]
    %v386 = vld [vmem:[%s6 + $0x50] sm:$0xff]
    %v387 = vld [vmem:[%s6 + $0x58] sm:$0xff]
    %v388 = vld [vmem:[%s6 + $0x60] sm:$0xff]
    %v389 = vld [vmem:[%s6 + $0x68] sm:$0xff]
    %v390 = vld [vmem:[%s6 + $0x70] sm:$0xff]
    %v391 = vld [vmem:[%s6 + $0x78] sm:$0xff]
    %393 = vset.pattern.permute.xlu0 0
    %394 = vperm.xlu0 %393, %v376
    %v395 = vpop.permute.xlu0 %394
    %398 = vset.pattern.permute.xlu0 0
    %399 = vperm.xlu0 %398, %v377
    %v400 = vpop.permute.xlu0 %399
    %403 = vset.pattern.permute.xlu0 0
    %404 = vperm.xlu0 %403, %v378
    %v405 = vpop.permute.xlu0 %404
    %408 = vset.pattern.permute.xlu0 0
    %409 = vperm.xlu0 %408, %v379
    %v410 = vpop.permute.xlu0 %409
    %413 = vset.pattern.permute.xlu0 0
    %414 = vperm.xlu0 %413, %v380
    %v415 = vpop.permute.xlu0 %414
    %418 = vset.pattern.permute.xlu0 0
    %419 = vperm.xlu0 %418, %v381
    %v420 = vpop.permute.xlu0 %419
    %423 = vset.pattern.permute.xlu0 0
    %424 = vperm.xlu0 %423, %v382
    %v425 = vpop.permute.xlu0 %424
    %428 = vset.pattern.permute.xlu0 0
    %429 = vperm.xlu0 %428, %v383
    %v430 = vpop.permute.xlu0 %429
    %433 = vset.pattern.permute.xlu0 0
    %434 = vperm.xlu0 %433, %v384
    %v435 = vpop.permute.xlu0 %434
    %438 = vset.pattern.permute.xlu0 0
    %439 = vperm.xlu0 %438, %v385
    %v440 = vpop.permute.xlu0 %439
    %443 = vset.pattern.permute.xlu0 0
    %444 = vperm.xlu0 %443, %v386
    %v445 = vpop.permute.xlu0 %444
    %448 = vset.pattern.permute.xlu0 0
    %449 = vperm.xlu0 %448, %v387
    %v450 = vpop.permute.xlu0 %449
    %453 = vset.pattern.permute.xlu0 0
    %454 = vperm.xlu0 %453, %v388
    %v455 = vpop.permute.xlu0 %454
    %458 = vset.pattern.permute.xlu0 0
    %459 = vperm.xlu0 %458, %v389
    %v460 = vpop.permute.xlu0 %459
    %463 = vset.pattern.permute.xlu0 0
    %464 = vperm.xlu0 %463, %v390
    %v465 = vpop.permute.xlu0 %464
    %468 = vset.pattern.permute.xlu0 0
    %469 = vperm.xlu0 %468, %v391
    %v470 = vpop.permute.xlu0 %469
    %472 = vmatpush.msra.mxu0 %v359
    %473 = vmatpush.msra.mxu0 %v358
    %474 = vmatpush.msra.mxu0 %v357
    %475 = vmatpush.msra.mxu0 %v356
    %476 = vmatpush.msra.mxu0 %v355
    %477 = vmatpush.msra.mxu0 %v354
    %478 = vmatpush.msra.mxu0 %v353
    %479 = vmatpush.msra.mxu0 %v352
    %480 = vmatpush.msra.mxu0 %v351
    %481 = vmatpush.msra.mxu0 %v350
    %482 = vmatpush.msra.mxu0 %v349
    %483 = vmatpush.msra.mxu0 %v348
    %484 = vmatpush.msra.mxu0 %v347
    %485 = vmatpush.msra.mxu0 %v346
    %486 = vmatpush.msra.mxu0 %v345
    %487 = vmatpush.msra.mxu0 %v344
    %488 = vmatmul.f32.gmra.mxu0 %v360
    %v489 = vpop.f32.mrf.mxu0
    %v490 = vadd.f32 %v395, %v489
    %491 = vmatmul.f32.gmra.mxu0 %v361
    %v492 = vpop.f32.mrf.mxu0
    %v493 = vadd.f32 %v400, %v492
    %494 = vmatmul.f32.gmra.mxu0 %v362
    %v495 = vpop.f32.mrf.mxu0
    %v496 = vadd.f32 %v405, %v495
    %497 = vmatmul.f32.gmra.mxu0 %v363
    %v498 = vpop.f32.mrf.mxu0
    %v499 = vadd.f32 %v410, %v498
    %500 = vmatmul.f32.gmra.mxu0 %v364
    %v501 = vpop.f32.mrf.mxu0
    %v502 = vadd.f32 %v415, %v501
    %503 = vmatmul.f32.gmra.mxu0 %v365
    %v504 = vpop.f32.mrf.mxu0
    %v505 = vadd.f32 %v420, %v504
    %506 = vmatmul.f32.gmra.mxu0 %v366
    %v507 = vpop.f32.mrf.mxu0
    %v508 = vadd.f32 %v425, %v507
    %509 = vmatmul.f32.gmra.mxu0 %v367
    %v510 = vpop.f32.mrf.mxu0
    %v511 = vadd.f32 %v430, %v510
    %512 = vmatmul.f32.gmra.mxu0 %v368
    %v513 = vpop.f32.mrf.mxu0
    %v514 = vadd.f32 %v435, %v513
    %515 = vmatmul.f32.gmra.mxu0 %v369
    %v516 = vpop.f32.mrf.mxu0
    %v517 = vadd.f32 %v440, %v516
    %518 = vmatmul.f32.gmra.mxu0 %v370
    %v519 = vpop.f32.mrf.mxu0
    %v520 = vadd.f32 %v445, %v519
    %521 = vmatmul.f32.gmra.mxu0 %v371
    %v522 = vpop.f32.mrf.mxu0
    %v523 = vadd.f32 %v450, %v522
    %524 = vmatmul.f32.gmra.mxu0 %v372
    %v525 = vpop.f32.mrf.mxu0
    %v526 = vadd.f32 %v455, %v525
    %527 = vmatmul.f32.gmra.mxu0 %v373
    %v528 = vpop.f32.mrf.mxu0
    %v529 = vadd.f32 %v460, %v528
    %530 = vmatmul.f32.gmra.mxu0 %v374
    %v531 = vpop.f32.mrf.mxu0
    %v532 = vadd.f32 %v465, %v531
    %533 = vmatmul.f32.gmra.mxu0 %v375
    %v534 = vpop.f32.mrf.mxu0
    %v535 = vadd.f32 %v470, %v534
    %536 = vdwg.mxu0
    %v537 = vmax.f32 %v490, 0.0
    %v538 = vmax.f32 %v493, 0.0
    %v539 = vmax.f32 %v496, 0.0
    %v540 = vmax.f32 %v499, 0.0
    %v541 = vmax.f32 %v502, 0.0
    %v542 = vmax.f32 %v505, 0.0
    %v543 = vmax.f32 %v508, 0.0
    %v544 = vmax.f32 %v511, 0.0
    %v545 = vmax.f32 %v514, 0.0
    %v546 = vmax.f32 %v517, 0.0
    %v547 = vmax.f32 %v520, 0.0
    %v548 = vmax.f32 %v523, 0.0
    %v549 = vmax.f32 %v526, 0.0
    %v550 = vmax.f32 %v529, 0.0
    %v551 = vmax.f32 %v532, 0.0
    %v552 = vmax.f32 %v535, 0.0
    %v553 = vld [vmem:[%s7] sm:$0x3]
    %v554 = vld [vmem:[%s8] sm:$0x3]
    %556 = vset.pattern.permute.xlu0 0
    %557 = vperm.xlu0 %556, %v554
    %v558 = vpop.permute.xlu0 %557
    %560 = vmatpush.msra.mxu0 %v552
    %561 = vmatpush.msra.mxu0 %v551
    %562 = vmatpush.msra.mxu0 %v550
    %563 = vmatpush.msra.mxu0 %v549
    %564 = vmatpush.msra.mxu0 %v548
    %565 = vmatpush.msra.mxu0 %v547
    %566 = vmatpush.msra.mxu0 %v546
    %567 = vmatpush.msra.mxu0 %v545
    %568 = vmatpush.msra.mxu0 %v544
    %569 = vmatpush.msra.mxu0 %v543
    %570 = vmatpush.msra.mxu0 %v542
    %571 = vmatpush.msra.mxu0 %v541
    %572 = vmatpush.msra.mxu0 %v540
    %573 = vmatpush.msra.mxu0 %v539
    %574 = vmatpush.msra.mxu0 %v538
    %575 = vmatpush.msra.mxu0 %v537
    %576 = vmatmul.f32.gmra.mxu0 %v553
    %v577 = vpop.f32.mrf.mxu0
    %v578 = vadd.f32 %v558, %v577
    %579 = vdwg.mxu0
    %v580 = vlaneseq
    %v581 = vshrl.u32 %v580, 7
    %vm582 = vcmp.lt.s32.totalorder %v581, 1
    %vm583 = vcmp.gt.f32.partialorder %v578, 20.0
    %v584 = vmin.f32 %v578, 20.0
    %v585 = vmul.f32 %v584, 1.442695
    %v586 = vpow.pop %v585
    %v587 = vadd.f32 %v586, 1.0
    %v588 = vlog2.pop %v587
    %v589 = vmul.f32 %v588, 0.6931472
    %v590 = vmul.f32 -0.5, %v586
    %v591 = vadd.f32 %v590, 1.0
    %v592 = vmul.f32 %v591, %v586
    %v593 = vand.u32 2147483647, %v586
    %vm594 = vcmp.lt.f32.partialorder %v593, 0.0004427343
    %v595 = vsel %vm594, %v592, %v589
    %v596 = vsel %vm583, %v578, %v595
    %v597 = vmul.f32 %v596, 0.9
    %v598 = vadd.f32 %v597, 0.1
    %v599 = vsel %vm582, %v578, %v598
    %vm600 = vcmask 123904
    %601 = vst.msk [vmem:[#allocation2] sm:$0x3] %vm600, %v599
    // Predicated region
    $region38: #{tpu_custom_call.1} parent=1 // pred_check
      _
    $region39: #{tpu_custom_call.1} parent=1 // pred_check_branch
      %603 = sbr.rel (0) target = $region41
    $region40: #{tpu_custom_call.1} parent=1 // pred_region
      %605 = vsyncadd [#allocation3], 0
      %s607 = sshll.u32 [#allocation2], 4
      %s608 = int_to_ptr.vmem [resolvable:$true] %s607
      %s609 = sshll.u32 %s9, 4
      %s610 = int_to_ptr.hbm [resolvable:$true] %s609
      %612 = dma.vmem_to_hbm [thread:$0]  %s608, 32, %s610, [#allocation3]
    $region41: #{tpu_custom_call.1} parent=1 // pred_fallthru
      _
    // Predicated region
    $region42: #{tpu_custom_call.1} parent=1 // pred_check
      _
    $region43: #{tpu_custom_call.1} parent=1 // pred_check_branch
      %614 = sbr.rel (0) target = $region45
    $region44: #{tpu_custom_call.1} parent=1 // pred_region
      %616 = dma.done [#allocation3], 32
    $region45: #{tpu_custom_call.1} parent=1 // pred_fallthru
      _
    %617 = vsyncpa [#allocation3], 1

</llo_original>
